<compile_context>
chip_gen: v7x
topology: tpu7x:2x2x1
jax: 0.10.0
libtpu: 0.0.40
codegen_flags: <defaults>
</compile_context>

<pallas_src>
import functools

import jax
import jax.numpy as jnp
from jax.experimental import pallas as pl
from jax.experimental.pallas import tpu as pltpu


def _pad_block(v, ph0, ph1, pw0, pw1):
    """Surround a (1, H, W) block with zero borders (all sizes static)."""
    n, h, w = v.shape
    dt = v.dtype
    parts = []
    if pw0:
        parts.append(jnp.zeros((n, h, pw0), dt))
    parts.append(v)
    if pw1:
        parts.append(jnp.zeros((n, h, pw1), dt))
    v = jnp.concatenate(parts, axis=2) if len(parts) > 1 else v

    tw = pw0 + w + pw1
    parts = []
    if ph0:
        parts.append(jnp.zeros((n, ph0, tw), dt))
    parts.append(v)
    if ph1:
        parts.append(jnp.zeros((n, ph1, tw), dt))
    return jnp.concatenate(parts, axis=1) if len(parts) > 1 else v


def _norm_pad_kernel(stats_ref, x_ref, y_ref, xo_ref, yo_ref, *,
                     ph0, ph1, pw0, pw1):
    # stats_ref (SMEM, f32[4]) = [x_min, 1/x_range, y_min, 1/y_range].
    x_n = (x_ref[...].astype(jnp.float32) - stats_ref[0]) * stats_ref[1]
    y_n = (y_ref[...].astype(jnp.float32) - stats_ref[2]) * stats_ref[3]
    # Build the padded plane in-register, then ONE dense full-block store each.
    xo_ref[...] = _pad_block(x_n, ph0, ph1, pw0, pw1).astype(xo_ref.dtype)
    yo_ref[...] = _pad_block(y_n, ph0, ph1, pw0, pw1).astype(yo_ref.dtype)


def pad_to_target_m(t, target_h, target_w):
    """Forward pass of PadToTargetM for NCHW inputs (x, y)."""
    x, y = t
    if x.shape != y.shape:
        raise ValueError("fused kernel expects x and y with identical shapes")
    B, C, H, W = x.shape
    pad_h, pad_w = target_h - H, target_w - W
    assert pad_h >= 0 and pad_w >= 0, "target size must be >= input spatial size"
    ph0, pw0 = pad_h // 2, pad_w // 2
    ph1, pw1 = pad_h - ph0, pad_w - pw0

    # Wrapper-side global reduce (exact scalar reciprocal keeps the kernel a
    # pure streaming multiply-add pass).
    x_min = jnp.min(x).astype(jnp.float32)
    y_min = jnp.min(y).astype(jnp.float32)
    x_inv = 1.0 / (jnp.max(x).astype(jnp.float32) - x_min)
    y_inv = 1.0 / (jnp.max(y).astype(jnp.float32) - y_min)
    stats = jnp.stack([x_min, x_inv, y_min, y_inv])

    # Free contiguous reshapes: stream one (H, W) plane per grid step.
    x_planes = x.reshape(B * C, H, W)
    y_planes = y.reshape(B * C, H, W)

    kernel = functools.partial(_norm_pad_kernel,
                               ph0=ph0, ph1=ph1, pw0=pw0, pw1=pw1)
    out_shape = (
        jax.ShapeDtypeStruct((B * C, target_h, target_w), x.dtype),
        jax.ShapeDtypeStruct((B * C, target_h, target_w), y.dtype),
    )
    xo, yo = pl.pallas_call(
        kernel,
        grid=(B * C,),
        in_specs=[
            pl.BlockSpec(memory_space=pltpu.MemorySpace.SMEM),   # stats scalars
            pl.BlockSpec((1, H, W), lambda p: (p, 0, 0)),
            pl.BlockSpec((1, H, W), lambda p: (p, 0, 0)),
        ],
        out_specs=(
            pl.BlockSpec((1, target_h, target_w), lambda p: (p, 0, 0)),
            pl.BlockSpec((1, target_h, target_w), lambda p: (p, 0, 0)),
        ),
        out_shape=out_shape,
        compiler_params=pltpu.CompilerParams(
            dimension_semantics=("parallel",),  # shard planes across v7x's 2 TCs
        ),
    )(stats, x_planes, y_planes)

    return (xo.reshape(B, C, target_h, target_w),
            yo.reshape(B, C, target_h, target_w))


def _reference(x, target_h, target_w):
    x_min = jnp.min(x)
    x_n = (x - x_min) / (jnp.max(x) - x_min)
    H, W = x.shape[-2], x.shape[-1]
    ph, pw = target_h - H, target_w - W
    return jnp.pad(
        x_n,
        ((0, 0), (0, 0), (ph // 2, ph - ph // 2), (pw // 2, pw - pw // 2)),
        mode="constant",
        constant_values=0.0,
    )


if __name__ == "__main__":
    B, C, H, W = 2, 4, 16, 16
    target_h, target_w = 24, 32

    key = jax.random.PRNGKey(0)
    kx, ky = jax.random.split(key)
    # Non-trivial value ranges so the min-max normalization is meaningful.
    x = 3.0 * jax.random.normal(kx, (B, C, H, W), dtype=jnp.float32) + 1.5
    y = 7.0 * jax.random.uniform(ky, (B, C, H, W), dtype=jnp.float32) - 2.0

    x_p, y_p = pad_to_target_m((x, y), target_h, target_w)
    x_p = jax.block_until_ready(x_p)
    y_p = jax.block_until_ready(y_p)

    x_ref = _reference(x, target_h, target_w)
    y_ref = _reference(y, target_h, target_w)

    assert x_p.shape == (B, C, target_h, target_w)
    assert y_p.shape == (B, C, target_h, target_w)
    assert x_p.dtype == x.dtype and y_p.dtype == y.dtype
    # Kernel uses (x - min) * (1/range); reference uses a per-element divide:
    # difference is a couple of ulps on values in [0, 1].
    assert jnp.allclose(x_p, x_ref, rtol=1e-6, atol=1e-6)
    assert jnp.allclose(y_p, y_ref, rtol=1e-6, atol=1e-6)
    # Padded border must be exactly zero.
    assert float(x_p[0, 0, 0, 0]) == 0.0
    assert float(y_p[0, 0, 0, -1]) == 0.0

    print("KERNEL_OK")
</pallas_src>

<mosaic_0001>
module attributes {stable_mosaic.version = 11 : i64} {
  func.func @_norm_pad_kernel(%arg0: i32, %arg1: memref<4xf32, #tpu.memory_space<smem>>, %arg2: memref<1x16x16xf32, #tpu.memory_space<vmem>>, %arg3: memref<1x16x16xf32, #tpu.memory_space<vmem>>, %arg4: memref<1x24x32xf32, #tpu.memory_space<vmem>>, %arg5: memref<1x24x32xf32, #tpu.memory_space<vmem>>) attributes {dimension_semantics = [#tpu.dimension_semantics<parallel>], iteration_bounds = array<i64: 8>, scalar_prefetch = 0 : i64, scratch_operands = 0 : i64, tpu.core_type = #tpu.core_type<tc>, window_params = [{transform_indices = @transform_0, window_bounds = array<i64: 4>}, {transform_indices = @transform_1, window_bounds = array<i64: 1, 16, 16>}, {transform_indices = @transform_2, window_bounds = array<i64: 1, 16, 16>}, {transform_indices = @transform_3, window_bounds = array<i64: 1, 24, 32>}, {transform_indices = @transform_4, window_bounds = array<i64: 1, 24, 32>}]} {
    %c0 = arith.constant 0 : index
    %c0_0 = arith.constant 0 : index
    %c0_1 = arith.constant 0 : index
    %0 = vector.load %arg2[%c0, %c0_0, %c0_1] : memref<1x16x16xf32, #tpu.memory_space<vmem>>, vector<1x16x16xf32>
    %c0_2 = arith.constant 0 : index
    %1 = memref.load %arg1[%c0_2] : memref<4xf32, #tpu.memory_space<smem>>
    %2 = vector.broadcast %1 : f32 to vector<1x16x16xf32>
    %3 = arith.subf %0, %2 : vector<1x16x16xf32>
    %c1 = arith.constant 1 : index
    %4 = memref.load %arg1[%c1] : memref<4xf32, #tpu.memory_space<smem>>
    %5 = vector.broadcast %4 : f32 to vector<1x16x16xf32>
    %6 = arith.mulf %3, %5 : vector<1x16x16xf32>
    %c0_3 = arith.constant 0 : index
    %c0_4 = arith.constant 0 : index
    %c0_5 = arith.constant 0 : index
    %7 = vector.load %arg3[%c0_3, %c0_4, %c0_5] : memref<1x16x16xf32, #tpu.memory_space<vmem>>, vector<1x16x16xf32>
    %c2 = arith.constant 2 : index
    %8 = memref.load %arg1[%c2] : memref<4xf32, #tpu.memory_space<smem>>
    %9 = vector.broadcast %8 : f32 to vector<1x16x16xf32>
    %10 = arith.subf %7, %9 : vector<1x16x16xf32>
    %c3 = arith.constant 3 : index
    %11 = memref.load %arg1[%c3] : memref<4xf32, #tpu.memory_space<smem>>
    %12 = vector.broadcast %11 : f32 to vector<1x16x16xf32>
    %13 = arith.mulf %10, %12 : vector<1x16x16xf32>
    %cst = arith.constant 0.000000e+00 : f32
    %14 = vector.broadcast %cst : f32 to vector<1x16x8xf32>
    %cst_6 = arith.constant 0.000000e+00 : f32
    %15 = vector.broadcast %cst_6 : f32 to vector<1x16x8xf32>
    %16 = tpu.concatenate %14, %6, %15 in 2 : vector<1x16x8xf32>, vector<1x16x16xf32>, vector<1x16x8xf32> -> vector<1x16x32xf32>
    %cst_7 = arith.constant 0.000000e+00 : f32
    %17 = vector.broadcast %cst_7 : f32 to vector<1x4x32xf32>
    %cst_8 = arith.constant 0.000000e+00 : f32
    %18 = vector.broadcast %cst_8 : f32 to vector<1x4x32xf32>
    %19 = tpu.concatenate %17, %16, %18 in 1 : vector<1x4x32xf32>, vector<1x16x32xf32>, vector<1x4x32xf32> -> vector<1x24x32xf32>
    %c0_9 = arith.constant 0 : index
    %c0_10 = arith.constant 0 : index
    %c0_11 = arith.constant 0 : index
    %20 = vector.load %arg4[%c0_9, %c0_10, %c0_11] : memref<1x24x32xf32, #tpu.memory_space<vmem>>, vector<1x24x32xf32>
    tpu.vector_store %arg4[%c0_9, %c0_10, %c0_11], %19 {strides = array<i32>} : memref<1x24x32xf32, #tpu.memory_space<vmem>>, vector<1x24x32xf32>,
    %cst_12 = arith.constant 0.000000e+00 : f32
    %21 = vector.broadcast %cst_12 : f32 to vector<1x16x8xf32>
    %cst_13 = arith.constant 0.000000e+00 : f32
    %22 = vector.broadcast %cst_13 : f32 to vector<1x16x8xf32>
    %23 = tpu.concatenate %21, %13, %22 in 2 : vector<1x16x8xf32>, vector<1x16x16xf32>, vector<1x16x8xf32> -> vector<1x16x32xf32>
    %cst_14 = arith.constant 0.000000e+00 : f32
    %24 = vector.broadcast %cst_14 : f32 to vector<1x4x32xf32>
    %cst_15 = arith.constant 0.000000e+00 : f32
    %25 = vector.broadcast %cst_15 : f32 to vector<1x4x32xf32>
    %26 = tpu.concatenate %24, %23, %25 in 1 : vector<1x4x32xf32>, vector<1x16x32xf32>, vector<1x4x32xf32> -> vector<1x24x32xf32>
    %c0_16 = arith.constant 0 : index
    %c0_17 = arith.constant 0 : index
    %c0_18 = arith.constant 0 : index
    %27 = vector.load %arg5[%c0_16, %c0_17, %c0_18] : memref<1x24x32xf32, #tpu.memory_space<vmem>>, vector<1x24x32xf32>
    tpu.vector_store %arg5[%c0_16, %c0_17, %c0_18], %26 {strides = array<i32>} : memref<1x24x32xf32, #tpu.memory_space<vmem>>, vector<1x24x32xf32>,
    return
  }
  func.func @transform_0(%arg0: i32) -> i32 {
    %c0_i32 = arith.constant 0 : i32
    %c0_i32_0 = arith.constant 0 : i32
    return %c0_i32 : i32
  }
  func.func @transform_1(%arg0: i32) -> (i32, i32, i32) {
    %c0_i32 = arith.constant 0 : i32
    %c0_i32_0 = arith.constant 0 : i32
    %c0_i32_1 = arith.constant 0 : i32
    return %arg0, %c0_i32, %c0_i32_0 : i32, i32, i32
  }
  func.func @transform_2(%arg0: i32) -> (i32, i32, i32) {
    %c0_i32 = arith.constant 0 : i32
    %c0_i32_0 = arith.constant 0 : i32
    %c0_i32_1 = arith.constant 0 : i32
    return %arg0, %c0_i32, %c0_i32_0 : i32, i32, i32
  }
  func.func @transform_3(%arg0: i32) -> (i32, i32, i32) {
    %c0_i32 = arith.constant 0 : i32
    %c0_i32_0 = arith.constant 0 : i32
    %c0_i32_1 = arith.constant 0 : i32
    return %arg0, %c0_i32, %c0_i32_0 : i32, i32, i32
  }
  func.func @transform_4(%arg0: i32) -> (i32, i32, i32) {
    %c0_i32 = arith.constant 0 : i32
    %c0_i32_0 = arith.constant 0 : i32
    %c0_i32_1 = arith.constant 0 : i32
    return %arg0, %c0_i32, %c0_i32_0 : i32, i32, i32
  }
}

</mosaic_0001>

<llo_original>
// kernel: tpu_custom_call.1
$region0: #{tpu_custom_call.1}
  #allocation0 [shape = 'u32[]', space=smem, size = 0x4, offset = 0x4, fixed_abs, tag = 'smem constant byte address 0x4 - core index']
  #allocation1 [shape = 'u32[144,128]{1,0:T(1,128)}', space=vmem, size = 0x12000, scoped, tag = 'internal scratch']
  %s0 = inlined_call_operand.hbm [shape: f32[4], index: 0, kind: input, shape index: {}]
  %s1 = inlined_call_operand.hbm [shape: f32[8,16,16], index: 1, kind: input, shape index: {}]
  %s2 = inlined_call_operand.hbm [shape: f32[8,16,16], index: 2, kind: input, shape index: {}]
  %s3 = inlined_call_operand.hbm [shape: f32[8,24,32], index: 3, kind: output, shape index: {0}]
  %s4 = inlined_call_operand.hbm [shape: f32[8,24,32], index: 4, kind: output, shape index: {1}]
  %5 = xla_tuple %s3, %s4
  %s6 = sld [smem:[#allocation0]]
  $region65: #{tpu_custom_call.1} parent=0
    _
  %s8 = ssub.s32 1, %s6
  %s9 = scalar_select 0, %s8, %s6
  $region1: #{tpu_custom_call.1} parent=0
    #allocation2 [shape = 'u8[512]{0}', space=smem, size = 0x200, scoped, tag = 'input window, operand 0, single buffered']
    #allocation3 [shape = 's32[2]{0}', space=sflag, size = 0x8, scoped, tag = 'scoped memory for tpu_custom_call.1']
    #allocation4 [shape = 's32[2]{0}', space=sflag, size = 0x8, scoped, tag = 'scoped memory for tpu_custom_call.1']
    #allocation5 [shape = 's32[2]{0}', space=sflag, size = 0x8, scoped, tag = 'scoped memory for tpu_custom_call.1']
    #allocation6 [shape = 'u8[16384]{0}', space=vmem, size = 0x4000, scoped, tag = 'input window, operand 1']
    #allocation7 [shape = 'u8[16384]{0}', space=vmem, size = 0x4000, scoped, tag = 'input window, operand 2']
    #allocation8 [shape = 's32[2]{0}', space=sflag, size = 0x8, scoped, tag = 'scoped memory for tpu_custom_call.1']
    #allocation9 [shape = 'u8[24576]{0}', space=vmem, size = 0x6000, scoped, tag = 'output window, operand 0']
    #allocation10 [shape = 'u8[24576]{0}', space=vmem, size = 0x6000, scoped, tag = 'output window, operand 1']
    #allocation11 [shape = 's32[2]{0}', space=sflag, size = 0x8, scoped, tag = 'scoped memory for tpu_custom_call.1']
    %10 = vsyncpa [#allocation5], 0
    %11 = vsyncpa [#allocation3], 0
    %s12 = scalar_lea.sflag [#allocation3], 1
    %13 = vsyncpa %s12, 0
    %14 = vsyncpa [#allocation8], 0
    %s15 = scalar_lea.sflag [#allocation8], 1
    %16 = vsyncpa %s15, 0
    %17 = vsyncpa [#allocation4], 0
    %s18 = scalar_lea.sflag [#allocation4], 1
    %19 = vsyncpa %s18, 0
    %20 = vsyncpa [#allocation11], 0
    %s21 = scalar_lea.sflag [#allocation11], 1
    %22 = vsyncpa %s21, 0
    loop: start=0, step=1, limit=10
    $region2: #{tpu_custom_call.1} parent=1 // loop_pre_header
      _
    $region3: #{tpu_custom_call.1} parent=1 // loop_header
      %s24 = sphi 0, %s28
      %p25 = scmp.ge.s32.totalorder %s24, 10
      %s32 = sphi 0, %s32
      %s34 = sphi 0, %s32
      %s35 = sphi 0, %s34
      %s49 = sphi 0, %s35
      %s55 = sphi 0, %s57
      %s58 = sphi 0, %s55
      %s59 = sphi 0, %s58
      %s75 = sphi 0, %s59
      %s81 = sphi 0, %s83
      %s84 = sphi 0, %s81
      %s85 = sphi 0, %s84
      %s101 = sphi 0, %s85
      %s107 = sphi 0, %s109
      %s110 = sphi 0, %s107
      %s111 = sphi 0, %s110
      %s127 = sphi 0, %s111
      %s133 = sphi 0, %s135
      %s136 = sphi 0, %s133
      %s137 = sphi 0, %s136
      %s153 = sphi 0, %s137
    $region4: #{tpu_custom_call.1} parent=1 // loop_header_branch
      %27 = sbr.rel (%p25) target = $region8
    $region5: #{tpu_custom_call.1} parent=1 // loop_body
      %s29 = ssub.s32 %s24, 1
      %s30 = ssub.s32 %s24, 2
      %s31 = sadd.s32 %s24, 1
      %s33 = sadd.s32 %s32, 1
      %p36 = scmp.eq.s32.totalorder %s24, 7
      %p37 = scmp.ne.s32.totalorder %s32, %s34
      %p38 = scmp.eq.s32.totalorder %s24, 0
      %p39 = por %p37, %p38
      %p40 = scmp.ne.s32.totalorder %s32, %s34
      %p41 = scmp.eq.s32.totalorder %s29, 7
      %p42 = por %p40, %p41
      %p43 = scmp.ne.s32.totalorder %s34, %s35
      %p44 = scmp.eq.s32.totalorder %s29, 0
      %p45 = por %p43, %p44
      %p46 = scmp.ne.s32.totalorder %s34, %s35
      %p47 = scmp.eq.s32.totalorder %s30, 7
      %p48 = por %p46, %p47
      %p50 = scmp.ne.s32.totalorder %s35, %s49
      %p51 = scmp.eq.s32.totalorder %s30, 0
      %p52 = por %p50, %p51
      %s53 = ssub.s32 %s24, %s31
      %p54 = scmp.eq.s32.totalorder %s53, 0
      %s56 = sadd.s32 %s55, 1
      %s57 = scalar_select %p54, %s55, %s56
      %p60 = pneg %p54
      %p61 = scmp.eq.s32.totalorder %s24, 7
      %p62 = por %p60, %p61
      %p63 = scmp.ne.s32.totalorder %s55, %s58
      %p64 = scmp.eq.s32.totalorder %s24, 0
      %p65 = por %p63, %p64
      %p66 = scmp.ne.s32.totalorder %s55, %s58
      %p67 = scmp.eq.s32.totalorder %s29, 7
      %p68 = por %p66, %p67
      %p69 = scmp.ne.s32.totalorder %s58, %s59
      %p70 = scmp.eq.s32.totalorder %s29, 0
      %p71 = por %p69, %p70
      %p72 = scmp.ne.s32.totalorder %s58, %s59
      %p73 = scmp.eq.s32.totalorder %s30, 7
      %p74 = por %p72, %p73
      %p76 = scmp.ne.s32.totalorder %s59, %s75
      %p77 = scmp.eq.s32.totalorder %s30, 0
      %p78 = por %p76, %p77
      %s79 = ssub.s32 %s24, %s31
      %p80 = scmp.eq.s32.totalorder %s79, 0
      %s82 = sadd.s32 %s81, 1
      %s83 = scalar_select %p80, %s81, %s82
      %p86 = pneg %p80
      %p87 = scmp.eq.s32.totalorder %s24, 7
      %p88 = por %p86, %p87
      %p89 = scmp.ne.s32.totalorder %s81, %s84
      %p90 = scmp.eq.s32.totalorder %s24, 0
      %p91 = por %p89, %p90
      %p92 = scmp.ne.s32.totalorder %s81, %s84
      %p93 = scmp.eq.s32.totalorder %s29, 7
      %p94 = por %p92, %p93
      %p95 = scmp.ne.s32.totalorder %s84, %s85
      %p96 = scmp.eq.s32.totalorder %s29, 0
      %p97 = por %p95, %p96
      %p98 = scmp.ne.s32.totalorder %s84, %s85
      %p99 = scmp.eq.s32.totalorder %s30, 7
      %p100 = por %p98, %p99
      %p102 = scmp.ne.s32.totalorder %s85, %s101
      %p103 = scmp.eq.s32.totalorder %s30, 0
      %p104 = por %p102, %p103
      %s105 = ssub.s32 %s24, %s31
      %p106 = scmp.eq.s32.totalorder %s105, 0
      %s108 = sadd.s32 %s107, 1
      %s109 = scalar_select %p106, %s107, %s108
      %p112 = pneg %p106
      %p113 = scmp.eq.s32.totalorder %s24, 7
      %p114 = por %p112, %p113
      %p115 = scmp.ne.s32.totalorder %s107, %s110
      %p116 = scmp.eq.s32.totalorder %s24, 0
      %p117 = por %p115, %p116
      %p118 = scmp.ne.s32.totalorder %s107, %s110
      %p119 = scmp.eq.s32.totalorder %s29, 7
      %p120 = por %p118, %p119
      %p121 = scmp.ne.s32.totalorder %s110, %s111
      %p122 = scmp.eq.s32.totalorder %s29, 0
      %p123 = por %p121, %p122
      %p124 = scmp.ne.s32.totalorder %s110, %s111
      %p125 = scmp.eq.s32.totalorder %s30, 7
      %p126 = por %p124, %p125
      %p128 = scmp.ne.s32.totalorder %s111, %s127
      %p129 = scmp.eq.s32.totalorder %s30, 0
      %p130 = por %p128, %p129
      %s131 = ssub.s32 %s24, %s31
      %p132 = scmp.eq.s32.totalorder %s131, 0
      %s134 = sadd.s32 %s133, 1
      %s135 = scalar_select %p132, %s133, %s134
      %p138 = pneg %p132
      %p139 = scmp.eq.s32.totalorder %s24, 7
      %p140 = por %p138, %p139
      %p141 = scmp.ne.s32.totalorder %s133, %s136
      %p142 = scmp.eq.s32.totalorder %s24, 0
      %p143 = por %p141, %p142
      %p144 = scmp.ne.s32.totalorder %s133, %s136
      %p145 = scmp.eq.s32.totalorder %s29, 7
      %p146 = por %p144, %p145
      %p147 = scmp.ne.s32.totalorder %s136, %s137
      %p148 = scmp.eq.s32.totalorder %s29, 0
      %p149 = por %p147, %p148
      %p150 = scmp.ne.s32.totalorder %s136, %s137
      %p151 = scmp.eq.s32.totalorder %s30, 7
      %p152 = por %p150, %p151
      %p154 = scmp.ne.s32.totalorder %s137, %s153
      %p155 = scmp.eq.s32.totalorder %s30, 0
      %p156 = por %p154, %p155
      %p157 = scmp.le.s32.totalorder 1, %s24
      %p158 = scmp.lt.s32.totalorder %s24, 9
      %p159 = pnand %p157, %p158
      %p160 = pneg %p159
      // Predicated region
      $region9: #{tpu_custom_call.1} parent=5 // pred_check
        _
      $region10: #{tpu_custom_call.1} parent=5 // pred_check_branch
        %162 = sbr.rel (%p159) target = $region12
      $region11: #{tpu_custom_call.1} parent=5 // pred_region
        %s163 = ssub.s32 %s24, 1
        // Predicated region
        $region13: #{tpu_custom_call.1} parent=11 // pred_check
          %p164 = pneg %p45
        $region14: #{tpu_custom_call.1} parent=11 // pred_check_branch
          %166 = sbr.rel (%p164) target = $region16
        $region15: #{tpu_custom_call.1} parent=11 // pred_region
          %s168 = ssub.s32 16, 16
          %169 = vsyncadd [#allocation5], %s168
          %172 = dma.hbm_to_smem %s0, 16, [#allocation2], [#allocation5]
        $region16: #{tpu_custom_call.1} parent=11 // pred_fallthru
          _
      $region12: #{tpu_custom_call.1} parent=5 // pred_fallthru
        _
      %p173 = scmp.lt.s32.totalorder %s24, 8
      // Predicated region
      $region17: #{tpu_custom_call.1} parent=5 // pred_check
        %p174 = pneg %p173
      $region18: #{tpu_custom_call.1} parent=5 // pred_check_branch
        %176 = sbr.rel (%p174) target = $region20
      $region19: #{tpu_custom_call.1} parent=5 // pred_region
        // Predicated region
        $region21: #{tpu_custom_call.1} parent=19 // pred_check
          %p177 = pneg %p65
        $region22: #{tpu_custom_call.1} parent=19 // pred_check_branch
          %179 = sbr.rel (%p177) target = $region24
        $region23: #{tpu_custom_call.1} parent=19 // pred_region
          %s180 = sand.u32 %s55, 1
          %s181 = scalar_lea.sflag [#allocation3], %s180
          %s182 = sand.u32 %s55, 1
          %s183 = smul.addr %s182, 16
          %s184 = scalar_lea.vmem [#allocation6], %s183
          %s186 = ssub.s32 256, 256
          %187 = vsyncadd %s181, %s186
          %s188 = smul.addr %s24, 2
          %s189 = smul.addr %s188, 128
          %s190 = scalar_lea.hbm %s1, %s189
          %s191 = sshll.u32 %s184, 4
          %s192 = int_to_ptr.vmem [resolvable:$true] %s191
          %197 = dma.hbm_to_vmem [thread:$0]  %s190, 256, %s192, %s181, 128, 128, 8
        $region24: #{tpu_custom_call.1} parent=19 // pred_fallthru
          _
        // Predicated region
        $region25: #{tpu_custom_call.1} parent=19 // pred_check
          %p198 = pneg %p91
        $region26: #{tpu_custom_call.1} parent=19 // pred_check_branch
          %200 = sbr.rel (%p198) target = $region28
        $region27: #{tpu_custom_call.1} parent=19 // pred_region
          %s201 = sand.u32 %s81, 1
          %s202 = scalar_lea.sflag [#allocation8], %s201
          %s203 = sand.u32 %s81, 1
          %s204 = smul.addr %s203, 16
          %s205 = scalar_lea.vmem [#allocation7], %s204
          %s207 = ssub.s32 256, 256
          %208 = vsyncadd %s202, %s207
          %s209 = smul.addr %s24, 2
          %s210 = smul.addr %s209, 128
          %s211 = scalar_lea.hbm %s2, %s210
          %s212 = sshll.u32 %s205, 4
          %s213 = int_to_ptr.vmem [resolvable:$true] %s212
          %218 = dma.hbm_to_vmem [thread:$0]  %s211, 256, %s213, %s202, 128, 128, 8
        $region28: #{tpu_custom_call.1} parent=19 // pred_fallthru
          _
      $region20: #{tpu_custom_call.1} parent=5 // pred_fallthru
        _
      %p219 = scmp.le.s32.totalorder 1, %s24
      %p220 = scmp.lt.s32.totalorder %s24, 9
      %p221 = pnand %p219, %p220
      %p222 = pneg %p221
      // Predicated region
      $region29: #{tpu_custom_call.1} parent=5 // pred_check
        _
      $region30: #{tpu_custom_call.1} parent=5 // pred_check_branch
        %224 = sbr.rel (%p221) target = $region32
      $region31: #{tpu_custom_call.1} parent=5 // pred_region
        %s225 = ssub.s32 %s24, 1
        // Predicated region
        $region33: #{tpu_custom_call.1} parent=31 // pred_check
          %p226 = pneg %p45
        $region34: #{tpu_custom_call.1} parent=31 // pred_check_branch
          %228 = sbr.rel (%p226) target = $region36
        $region35: #{tpu_custom_call.1} parent=31 // pred_region
          %229 = dma.done [#allocation5], 16
        $region36: #{tpu_custom_call.1} parent=31 // pred_fallthru
          _
        %s230 = sand.u32 %s58, 1
        %s231 = scalar_lea.sflag [#allocation3], %s230
        %s232 = sand.u32 %s58, 1
        %s233 = smul.addr %s232, 16
        %s234 = scalar_lea.vmem [#allocation6], %s233
        // Predicated region
        $region37: #{tpu_custom_call.1} parent=31 // pred_check
          %p235 = pneg %p71
        $region38: #{tpu_custom_call.1} parent=31 // pred_check_branch
          %237 = sbr.rel (%p235) target = $region40
        $region39: #{tpu_custom_call.1} parent=31 // pred_region
          %238 = dma.done %s231, 256
        $region40: #{tpu_custom_call.1} parent=31 // pred_fallthru
          _
        %s239 = sand.u32 %s84, 1
        %s240 = scalar_lea.sflag [#allocation8], %s239
        %s241 = sand.u32 %s84, 1
        %s242 = smul.addr %s241, 16
        %s243 = scalar_lea.vmem [#allocation7], %s242
        // Predicated region
        $region41: #{tpu_custom_call.1} parent=31 // pred_check
          %p244 = pneg %p97
        $region42: #{tpu_custom_call.1} parent=31 // pred_check_branch
          %246 = sbr.rel (%p244) target = $region44
        $region43: #{tpu_custom_call.1} parent=31 // pred_region
          %247 = dma.done %s240, 256
        $region44: #{tpu_custom_call.1} parent=31 // pred_fallthru
          _
        %248 = sfence
        %p249 = pneg %p45
        %p250 = pneg %p42
        %s251 = sand.u32 %s58, 1
        %s252 = scalar_lea.sflag [#allocation3], %s251
        %s253 = sand.u32 %s58, 1
        %s254 = smul.addr %s253, 16
        %s255 = scalar_lea.vmem [#allocation6], %s254
        %p256 = pneg %p71
        %p257 = pneg %p68
        %s258 = sand.u32 %s84, 1
        %s259 = scalar_lea.sflag [#allocation8], %s258
        %s260 = sand.u32 %s84, 1
        %s261 = smul.addr %s260, 16
        %s262 = scalar_lea.vmem [#allocation7], %s261
        %p263 = pneg %p97
        %p264 = pneg %p94
        %p265 = pneg %p123
        %p266 = pneg %p120
        %s267 = sand.u32 %s110, 1
        %s268 = scalar_lea.sflag [#allocation4], %s267
        %s269 = sand.u32 %s110, 1
        %s270 = smul.addr %s269, 24
        %s271 = scalar_lea.vmem [#allocation9], %s270
        %p272 = pneg %p149
        %p273 = pneg %p146
        %s274 = sand.u32 %s136, 1
        %s275 = scalar_lea.sflag [#allocation11], %s274
        %s276 = sand.u32 %s136, 1
        %s277 = smul.addr %s276, 24
        %s278 = scalar_lea.vmem [#allocation10], %s277
        %v279 = vld [vmem:[%s234] sm:$0xff]
        %v280 = vld [vmem:[%s234 + $0x8] sm:$0xff]
        %s281 = sld [smem:[#allocation2]]
        %v282 = vstv %s281
        %v283 = vsub.f32 %v279, %v282
        %v284 = vsub.f32 %v280, %v282
        %s285 = sld [smem:[#allocation2 + $0x1]]
        %v286 = vstv %s285
        %v287 = vmul.f32 %v283, %v286
        %v288 = vmul.f32 %v284, %v286
        %v289 = vld [vmem:[%s243] sm:$0xff]
        %v290 = vld [vmem:[%s243 + $0x8] sm:$0xff]
        %s291 = sld [smem:[#allocation2 + $0x2]]
        %v292 = vstv %s291
        %v293 = vsub.f32 %v289, %v292
        %v294 = vsub.f32 %v290, %v292
        %s295 = sld [smem:[#allocation2 + $0x3]]
        %v296 = vstv %s295
        %v297 = vmul.f32 %v293, %v296
        %v298 = vmul.f32 %v294, %v296
        %301 = vrot.lane.b32.xlu0 %v287, 8
        %v302 = vpop.permute.xlu0 %301
        %303 = vrot.lane.b32.xlu0 %v288, 8
        %v304 = vpop.permute.xlu0 %303
        %vm307 = vcmask 64512
        %v308 = vsel %vm307, 0.0, %v302
        %v309 = vsel %vm307, 0.0, %v304
        %vm310 = vcmask 195584
        %v311 = vsel %vm310, %v308, 0.0
        %v312 = vsel %vm310, %v309, 0.0
        %vm315 = vcmask 1043456
        %v316 = vrot.slane %v311, 4
        %v317 = vrot.slane %v312, 4
        %v318 = vsel %vm315, %v316, %v317
        %v322 = vsel %vm315, 0.0, %v316
        %v323 = vsel %vm315, %v317, 0.0
        %vm324 = vcmask 261120
        %325 = vst.msk [vmem:[%s271] sm:$0xff] %vm324, %v322
        %326 = vst.msk [vmem:[%s271 + $0x8] sm:$0xff] %vm324, %v318
        %327 = vst.msk [vmem:[%s271 + $0x10] sm:$0xff] %vm324, %v323
        %330 = vrot.lane.b32.xlu0 %v297, 8
        %v331 = vpop.permute.xlu0 %330
        %332 = vrot.lane.b32.xlu0 %v298, 8
        %v333 = vpop.permute.xlu0 %332
        %v336 = vsel %vm307, 0.0, %v331
        %v337 = vsel %vm307, 0.0, %v333
        %v338 = vsel %vm310, %v336, 0.0
        %v339 = vsel %vm310, %v337, 0.0
        %v342 = vrot.slane %v338, 4
        %v343 = vrot.slane %v339, 4
        %v344 = vsel %vm315, %v342, %v343
        %v348 = vsel %vm315, 0.0, %v342
        %v349 = vsel %vm315, %v343, 0.0
        %350 = vst.msk [vmem:[%s278] sm:$0xff] %vm324, %v348
        %351 = vst.msk [vmem:[%s278 + $0x8] sm:$0xff] %vm324, %v344
        %352 = vst.msk [vmem:[%s278 + $0x10] sm:$0xff] %vm324, %v349
        %s353 = sand.u32 %s110, 1
        %s354 = scalar_lea.sflag [#allocation4], %s353
        %s355 = sand.u32 %s110, 1
        %s356 = smul.addr %s355, 24
        %s357 = scalar_lea.vmem [#allocation9], %s356
        %s358 = sand.u32 %s136, 1
        %s359 = scalar_lea.sflag [#allocation11], %s358
        %s360 = sand.u32 %s136, 1
        %s361 = smul.addr %s360, 24
        %s362 = scalar_lea.vmem [#allocation10], %s361
        // Predicated region
        $region45: #{tpu_custom_call.1} parent=31 // pred_check
          %p363 = pneg %p120
        $region46: #{tpu_custom_call.1} parent=31 // pred_check_branch
          %365 = sbr.rel (%p363) target = $region48
        $region47: #{tpu_custom_call.1} parent=31 // pred_region
          %s367 = ssub.s32 384, 384
          %368 = vsyncadd %s354, %s367
          %s369 = smul.addr %s29, 3
          %s370 = smul.addr %s369, 128
          %s371 = scalar_lea.hbm %s3, %s370
          %s372 = sshll.u32 %s357, 4
          %s373 = int_to_ptr.vmem [resolvable:$true] %s372
          %378 = dma.vmem_to_hbm [thread:$0]  %s373, 384, %s371, %s354, 128, 128, 8
        $region48: #{tpu_custom_call.1} parent=31 // pred_fallthru
          _
        // Predicated region
        $region49: #{tpu_custom_call.1} parent=31 // pred_check
          %p379 = pneg %p146
        $region50: #{tpu_custom_call.1} parent=31 // pred_check_branch
          %381 = sbr.rel (%p379) target = $region52
        $region51: #{tpu_custom_call.1} parent=31 // pred_region
          %s383 = ssub.s32 384, 384
          %384 = vsyncadd %s359, %s383
          %s385 = smul.addr %s29, 3
          %s386 = smul.addr %s385, 128
          %s387 = scalar_lea.hbm %s4, %s386
          %s388 = sshll.u32 %s362, 4
          %s389 = int_to_ptr.vmem [resolvable:$true] %s388
          %394 = dma.vmem_to_hbm [thread:$0]  %s389, 384, %s387, %s359, 128, 128, 8
        $region52: #{tpu_custom_call.1} parent=31 // pred_fallthru
          _
      $region32: #{tpu_custom_call.1} parent=5 // pred_fallthru
        _
      %p395 = scmp.le.s32.totalorder 2, %s24
      // Predicated region
      $region53: #{tpu_custom_call.1} parent=5 // pred_check
        %p396 = pneg %p395
      $region54: #{tpu_custom_call.1} parent=5 // pred_check_branch
        %398 = sbr.rel (%p396) target = $region56
      $region55: #{tpu_custom_call.1} parent=5 // pred_region
        %s399 = ssub.s32 %s24, 2
        // Predicated region
        $region57: #{tpu_custom_call.1} parent=55 // pred_check
          %p400 = pneg %p126
        $region58: #{tpu_custom_call.1} parent=55 // pred_check_branch
          %402 = sbr.rel (%p400) target = $region60
        $region59: #{tpu_custom_call.1} parent=55 // pred_region
          %s403 = sand.u32 %s111, 1
          %s404 = scalar_lea.sflag [#allocation4], %s403
          %s405 = sand.u32 %s111, 1
          %s406 = smul.addr %s405, 24
          %s407 = scalar_lea.vmem [#allocation9], %s406
          %408 = dma.done %s404, 384
        $region60: #{tpu_custom_call.1} parent=55 // pred_fallthru
          _
        // Predicated region
        $region61: #{tpu_custom_call.1} parent=55 // pred_check
          %p409 = pneg %p152
        $region62: #{tpu_custom_call.1} parent=55 // pred_check_branch
          %411 = sbr.rel (%p409) target = $region64
        $region63: #{tpu_custom_call.1} parent=55 // pred_region
          %s412 = sand.u32 %s137, 1
          %s413 = scalar_lea.sflag [#allocation11], %s412
          %s414 = sand.u32 %s137, 1
          %s415 = smul.addr %s414, 24
          %s416 = scalar_lea.vmem [#allocation10], %s415
          %417 = dma.done %s413, 384
        $region64: #{tpu_custom_call.1} parent=55 // pred_fallthru
          _
      $region56: #{tpu_custom_call.1} parent=5 // pred_fallthru
        _
    $region6: #{tpu_custom_call.1} parent=1 // loop_footer
      %s28 = sadd.s32 1, %s24
    $region7: #{tpu_custom_call.1} parent=1 // loop_footer_branch
      %23 = sbr.rel target = $region3
    $region8: #{tpu_custom_call.1} parent=1 // loop_exit
      _
    %418 = vsyncpa [#allocation3], 1
    %s419 = scalar_lea.sflag [#allocation3], 1
    %420 = vsyncpa %s419, 1
    %421 = vsyncpa [#allocation8], 1
    %s422 = scalar_lea.sflag [#allocation8], 1
    %423 = vsyncpa %s422, 1
    %424 = vsyncpa [#allocation4], 1
    %s425 = scalar_lea.sflag [#allocation4], 1
    %426 = vsyncpa %s425, 1
    %427 = vsyncpa [#allocation11], 1
    %s428 = scalar_lea.sflag [#allocation11], 1
    %429 = vsyncpa %s428, 1
    %430 = vsyncpa [#allocation5], 1
    %s431 = scalar_lea.sflag [#allocation5], 1
    %432 = vsyncpa %s431, 1

</llo_original>
